<compile_context>
chip_gen: v5e
topology: v5e:2x2
jax: 0.10.0
libtpu: 0.0.40
codegen_flags: <defaults>
</compile_context>

<pallas_src>
import functools

import jax
import jax.numpy as jnp
from jax import lax
from jax.experimental import pallas as pl
from jax.experimental.pallas import tpu as pltpu


def _rup(x, m):
    return (x + m - 1) // m * m


# ----------------------------- Pallas kernel --------------------------------
# Fused (patches @ weights) * scale + bias [+ ReLU], tiled over (M, N, K).

def _conv_mm_kernel(x_ref, w_ref, s_ref, b_ref, o_ref, acc_ref, *, relu):
    @pl.when(pl.program_id(2) == 0)
    def _init():
        acc_ref[...] = jnp.zeros_like(acc_ref)

    acc_ref[...] += jnp.dot(x_ref[...], w_ref[...],
                            preferred_element_type=jnp.float32)

    @pl.when(pl.program_id(2) == pl.num_programs(2) - 1)
    def _epilogue():
        y = acc_ref[...] * s_ref[...] + b_ref[...]
        if relu:
            y = jnp.maximum(y, 0.0)
        o_ref[...] = y.astype(o_ref.dtype)


def _choose_bm(m):
    # bf16 operands -> keep the sublane dim a multiple of 16.
    if m >= 256:
        return 256
    return max(16, _rup(m, 16))


def fused_matmul_scale_bias(x_bf, w_bf, scale, bias, *, bm, bn, bk, relu):
    """x_bf:(Mp,Kp) bf16, w_bf:(Kp,Np) bf16, scale/bias:(1,Np) f32.
    Returns (Mp,Np) f32 = [relu]((x @ w) * scale + bias), f32 accumulation."""
    Mp, Kp = x_bf.shape
    Kp2, Np = w_bf.shape
    assert Kp == Kp2 and Mp % bm == 0 and Np % bn == 0 and Kp % bk == 0
    grid = (Mp // bm, Np // bn, Kp // bk)
    return pl.pallas_call(
        functools.partial(_conv_mm_kernel, relu=relu),
        out_shape=jax.ShapeDtypeStruct((Mp, Np), jnp.float32),
        grid=grid,
        in_specs=[
            pl.BlockSpec((bm, bk), lambda i, j, k: (i, k)),
            pl.BlockSpec((bk, bn), lambda i, j, k: (k, j)),
            pl.BlockSpec((1, bn), lambda i, j, k: (0, j)),
            pl.BlockSpec((1, bn), lambda i, j, k: (0, j)),
        ],
        out_specs=pl.BlockSpec((bm, bn), lambda i, j, k: (i, j)),
        scratch_shapes=[pltpu.VMEM((bm, bn), jnp.float32)],
        compiler_params=pltpu.CompilerParams(
            dimension_semantics=("parallel", "parallel", "arbitrary"),
            vmem_limit_bytes=48 * 1024 * 1024,
        ),
    )(x_bf, w_bf, scale, bias)


# ------------------------ one-time parameter prep ----------------------------

def prepare_conv_bn(w_oikk, bn_params, conv_bias=None, *, stride, padding):
    """Fold eval-mode BN into per-output-channel scale/bias and pre-pack the
    conv weight into a padded (Kp, Np) bf16 matmul operand (done once)."""
    O, C, KH, KW = w_oikk.shape
    gamma, beta, rmean, rvar, eps = bn_params
    s = gamma / jnp.sqrt(rvar + eps)
    b = beta - rmean * s
    if conv_bias is not None:
        b = b + conv_bias * s

    K = KH * KW * C
    # im2col feature order is (kh, kw, c) -> weight (KH, KW, C, O) -> (K, O)
    wmat = jnp.transpose(w_oikk, (2, 3, 1, 0)).reshape(K, O)

    Kp = _rup(K, 128)
    bk = Kp if Kp <= 512 else 512
    Kp = _rup(K, bk)
    Np = _rup(O, 128)
    bn_tile = Np if Np <= 256 else 256
    Np = _rup(O, bn_tile)

    wmat = jnp.pad(wmat, ((0, Kp - K), (0, Np - O))).astype(jnp.bfloat16)
    scale = jnp.pad(s, (0, Np - O)).reshape(1, Np).astype(jnp.float32)
    bias = jnp.pad(b, (0, Np - O)).reshape(1, Np).astype(jnp.float32)
    return dict(w=wmat, scale=scale, bias=bias, KH=KH, KW=KW, C=C, O=O,
                K=K, Kp=Kp, Np=Np, bk=bk, bn=bn_tile,
                stride=stride, padding=padding)


# ----------------------------- conv / pooling -------------------------------

def conv2d_bn_relu_nhwc(x, cp, *, relu=True):
    """x:(N,H,W,C) f32 -> (N,Ho,Wo,O) f32 via the fused Pallas matmul."""
    N, H, W, C = x.shape
    KH, KW = cp['KH'], cp['KW']
    stride, pad = cp['stride'], cp['padding']
    assert C == cp['C']
    xp = jnp.pad(x, ((0, 0), (pad, pad), (pad, pad), (0, 0)))
    Ho = (H + 2 * pad - KH) // stride + 1
    Wo = (W + 2 * pad - KW) // stride + 1

    # im2col in channels-last feature order (kh, kw, c).
    # TODO(synk): extract patches inside the kernel from a halo'd VMEM tile to
    # avoid the KH*KW HBM blow-up for large spatial inputs.
    cols = []
    for ki in range(KH):
        for kj in range(KW):
            cols.append(lax.slice(
                xp, (0, ki, kj, 0),
                (N, ki + (Ho - 1) * stride + 1, kj + (Wo - 1) * stride + 1, C),
                (1, stride, stride, 1)))
    patches = jnp.stack(cols, axis=3).reshape(N * Ho * Wo, KH * KW * C)

    M, K = patches.shape
    bm = _choose_bm(M)
    Mp = _rup(M, bm)
    Kp = cp['Kp']
    patches = jnp.pad(patches, ((0, Mp - M), (0, Kp - K))).astype(jnp.bfloat16)

    y = fused_matmul_scale_bias(patches, cp['w'], cp['scale'], cp['bias'],
                                bm=bm, bn=cp['bn'], bk=cp['bk'], relu=relu)
    return y[:M, :cp['O']].reshape(N, Ho, Wo, cp['O'])


def avgpool_2x2_nhwc(x):
    N, H, W, C = x.shape
    He, We = (H // 2) * 2, (W // 2) * 2          # PyTorch floors odd sizes
    x = x[:, :He, :We, :]
    return x.reshape(N, He // 2, 2, We // 2, 2, C).mean(axis=(2, 4))


def maxpool_3x3_s2_p1_nhwc(x):
    return lax.reduce_window(
        x, -jnp.inf, lax.max,
        window_dimensions=(1, 3, 3, 1),
        window_strides=(1, 2, 2, 1),
        padding=((0, 0), (1, 1), (1, 1), (0, 0)))


def resize_nearest_nhwc(x, out_h, out_w):
    N, H, W, C = x.shape
    hi = (jnp.arange(out_h) * H) // out_h        # PyTorch 'nearest' indexing
    wi = (jnp.arange(out_w) * W) // out_w
    return x[:, hi][:, :, wi]


# ------------------------------ parameters ----------------------------------

def init_params(key):
    # Emulate STDM.__init__: take resnet_model1's conv1 weight (64, 3, 7, 7),
    # average over input channels and expand to 6 channels (diff input).
    w_resnet = 0.05 * jax.random.normal(key, (64, 3, 7, 7), jnp.float32)
    w_conv1_5 = jnp.broadcast_to(w_resnet.mean(axis=1, keepdims=True),
                                 (64, 6, 7, 7))
    # nn.BatchNorm2d(64), freshly initialised; evaluated with running stats.
    bn64 = (jnp.ones((64,), jnp.float32),        # gamma
            jnp.zeros((64,), jnp.float32),       # beta
            jnp.zeros((64,), jnp.float32),       # running_mean
            jnp.ones((64,), jnp.float32),        # running_var
            1e-5)
    conv1_5 = prepare_conv_bn(w_conv1_5, bn64, conv_bias=None,
                              stride=2, padding=3)
    return dict(conv1_5=conv1_5)


# ------------------------------ forward pass ---------------------------------

def stdm_forward(x_nchw, params):
    """x_nchw: (N, 9, H, W) -> (N, 64, 56, 56), matching STDM.forward."""
    x = jnp.transpose(x_nchw, (0, 2, 3, 1)).astype(jnp.float32)   # NHWC
    x1, x2, x3 = x[..., 0:3], x[..., 3:6], x[..., 6:9]
    d = jnp.concatenate([x2 - x1, x3 - x2], axis=-1)              # (N,H,W,6)
    d = avgpool_2x2_nhwc(d)                                       # avg_diff
    y = conv2d_bn_relu_nhwc(d, params['conv1_5'], relu=True)      # conv1_5
    y = maxpool_3x3_s2_p1_nhwc(y)                                 # maxpool_diff (1.0/1.0 * is identity)
    y = resize_nearest_nhwc(y, 56, 56)                            # F.interpolate((56,56))
    return jnp.transpose(y, (0, 3, 1, 2))                         # back to NCHW


# ---------------------------------- main -------------------------------------

if __name__ == "__main__":
    key = jax.random.PRNGKey(0)
    kp, kx = jax.random.split(key)
    params = init_params(kp)

    # (batch=2, 9 channels = 3 stacked RGB frames, 64x64 spatial)
    x = jax.random.normal(jax.random.PRNGKey(0), (2, 9, 64, 64), jnp.float32)

    fwd = jax.jit(lambda inp: stdm_forward(inp, params))
    out = fwd(x)
    jax.block_until_ready(out)

    assert out.shape == (2, 64, 56, 56), out.shape
    assert bool(jnp.all(jnp.isfinite(out)))
    print("KERNEL_OK")
</pallas_src>

<mosaic_0001>
module attributes {stable_mosaic.version = 11 : i64} {
  func.func @_conv_mm_kernel(%arg0: i32, %arg1: i32, %arg2: i32, %arg3: memref<256x384xbf16, #tpu.memory_space<vmem>>, %arg4: memref<384x128xbf16, #tpu.memory_space<vmem>>, %arg5: memref<1x128xf32, #tpu.memory_space<vmem>>, %arg6: memref<1x128xf32, #tpu.memory_space<vmem>>, %arg7: memref<256x128xf32, #tpu.memory_space<vmem>>, %arg8: memref<256x128xf32, #tpu.memory_space<vmem>>) attributes {dimension_semantics = [#tpu.dimension_semantics<parallel>, #tpu.dimension_semantics<parallel>, #tpu.dimension_semantics<arbitrary>], iteration_bounds = array<i64: 2, 1, 1>, scalar_prefetch = 0 : i64, scratch_operands = 1 : i64, tpu.core_type = #tpu.core_type<tc>, window_params = [{transform_indices = @transform_0, window_bounds = array<i64: 256, 384>}, {transform_indices = @transform_1, window_bounds = array<i64: 384, 128>}, {transform_indices = @transform_2, window_bounds = array<i64: 1, 128>}, {transform_indices = @transform_3, window_bounds = array<i64: 1, 128>}, {transform_indices = @transform_4, window_bounds = array<i64: 256, 128>}]} {
    %c0_i32 = arith.constant 0 : i32
    %0 = arith.cmpi eq, %arg2, %c0_i32 : i32
    %1 = arith.extui %0 : i1 to i32
    %c0_i32_0 = arith.constant 0 : i32
    %2 = arith.cmpi ne, %1, %c0_i32_0 : i32
    scf.if %2 {
      %cst_10 = arith.constant 0.000000e+00 : f32
      %12 = vector.broadcast %cst_10 : f32 to vector<256x128xf32>
      %c0_11 = arith.constant 0 : index
      %c0_12 = arith.constant 0 : index
      %13 = vector.load %arg8[%c0_11, %c0_12] : memref<256x128xf32, #tpu.memory_space<vmem>>, vector<256x128xf32>
      tpu.vector_store %arg8[%c0_11, %c0_12], %12 {strides = array<i32>} : memref<256x128xf32, #tpu.memory_space<vmem>>, vector<256x128xf32>,
    } else {
    }
    %c0 = arith.constant 0 : index
    %c0_1 = arith.constant 0 : index
    %3 = vector.load %arg8[%c0, %c0_1] : memref<256x128xf32, #tpu.memory_space<vmem>>, vector<256x128xf32>
    %c0_2 = arith.constant 0 : index
    %c0_3 = arith.constant 0 : index
    %4 = vector.load %arg3[%c0_2, %c0_3] : memref<256x384xbf16, #tpu.memory_space<vmem>>, vector<256x384xbf16>
    %c0_4 = arith.constant 0 : index
    %c0_5 = arith.constant 0 : index
    %5 = vector.load %arg4[%c0_4, %c0_5] : memref<384x128xbf16, #tpu.memory_space<vmem>>, vector<384x128xbf16>
    %cst = arith.constant dense<0.000000e+00> : vector<256x128xf32>
    %6 = tpu.matmul %4, %5, %cst {dimension_numbers = #tpu.dot_dimension_numbers<[1], [0], [0], [1], [0, 0, 1, 1], [], []>} : vector<256x384xbf16>, vector<384x128xbf16>, vector<256x128xf32> -> vector<256x128xf32>
    %7 = arith.addf %3, %6 : vector<256x128xf32>
    %c0_6 = arith.constant 0 : index
    %c0_7 = arith.constant 0 : index
    %8 = vector.load %arg8[%c0_6, %c0_7] : memref<256x128xf32, #tpu.memory_space<vmem>>, vector<256x128xf32>
    tpu.vector_store %arg8[%c0_6, %c0_7], %7 {strides = array<i32>} : memref<256x128xf32, #tpu.memory_space<vmem>>, vector<256x128xf32>,
    %c0_i32_8 = arith.constant 0 : i32
    %9 = arith.cmpi eq, %arg2, %c0_i32_8 : i32
    %10 = arith.extui %9 : i1 to i32
    %c0_i32_9 = arith.constant 0 : i32
    %11 = arith.cmpi ne, %10, %c0_i32_9 : i32
    scf.if %11 {
      %c0_10 = arith.constant 0 : index
      %c0_11 = arith.constant 0 : index
      %12 = vector.load %arg8[%c0_10, %c0_11] : memref<256x128xf32, #tpu.memory_space<vmem>>, vector<256x128xf32>
      %c0_12 = arith.constant 0 : index
      %c0_13 = arith.constant 0 : index
      %13 = vector.load %arg5[%c0_12, %c0_13] : memref<1x128xf32, #tpu.memory_space<vmem>>, vector<1x128xf32>
      %14 = vector.broadcast %13 : vector<1x128xf32> to vector<256x128xf32>
      %15 = arith.mulf %12, %14 : vector<256x128xf32>
      %c0_14 = arith.constant 0 : index
      %c0_15 = arith.constant 0 : index
      %16 = vector.load %arg6[%c0_14, %c0_15] : memref<1x128xf32, #tpu.memory_space<vmem>>, vector<1x128xf32>
      %17 = vector.broadcast %16 : vector<1x128xf32> to vector<256x128xf32>
      %18 = arith.addf %15, %17 : vector<256x128xf32>
      %cst_16 = arith.constant 0.000000e+00 : f32
      %19 = vector.broadcast %cst_16 : f32 to vector<256x128xf32>
      %20 = arith.maximumf %18, %19 : vector<256x128xf32>
      %c0_17 = arith.constant 0 : index
      %c0_18 = arith.constant 0 : index
      %21 = vector.load %arg7[%c0_17, %c0_18] : memref<256x128xf32, #tpu.memory_space<vmem>>, vector<256x128xf32>
      tpu.vector_store %arg7[%c0_17, %c0_18], %20 {strides = array<i32>} : memref<256x128xf32, #tpu.memory_space<vmem>>, vector<256x128xf32>,
    } else {
    }
    return
  }
  func.func @transform_0(%arg0: i32, %arg1: i32, %arg2: i32) -> (i32, i32) {
    %c0_i32 = arith.constant 0 : i32
    return %arg0, %arg2 : i32, i32
  }
  func.func @transform_1(%arg0: i32, %arg1: i32, %arg2: i32) -> (i32, i32) {
    %c0_i32 = arith.constant 0 : i32
    return %arg2, %arg1 : i32, i32
  }
  func.func @transform_2(%arg0: i32, %arg1: i32, %arg2: i32) -> (i32, i32) {
    %c0_i32 = arith.constant 0 : i32
    %c0_i32_0 = arith.constant 0 : i32
    return %c0_i32, %arg1 : i32, i32
  }
  func.func @transform_3(%arg0: i32, %arg1: i32, %arg2: i32) -> (i32, i32) {
    %c0_i32 = arith.constant 0 : i32
    %c0_i32_0 = arith.constant 0 : i32
    return %c0_i32, %arg1 : i32, i32
  }
  func.func @transform_4(%arg0: i32, %arg1: i32, %arg2: i32) -> (i32, i32) {
    %c0_i32 = arith.constant 0 : i32
    return %arg0, %arg1 : i32, i32
  }
}

</mosaic_0001>

<llo_original>
// kernel: _lambda_.1
$region0: #{_lambda_.1}
  #allocation0 [shape = 'u32[]', space=smem, size = 0x4, offset = 0x4, fixed_abs, tag = 'smem constant byte address 0x4 - core index']
  #allocation1 [shape = 'u32[72,128]{1,0:T(1,128)}', space=vmem, size = 0x9000, scoped, tag = 'internal scratch']
  #allocation2 [shape = 'f32[256,128]{1,0:T(8,128)}', space=vmem, size = 0x20000, scoped, tag = 'scratch operand']
  %s0 = inlined_call_operand.vmem [shape: bf16[512,384], index: 0, kind: input, shape index: {}]
  %s1 = inlined_call_operand.vmem [shape: bf16[384,128], index: 1, kind: input, shape index: {}]
  %s2 = inlined_call_operand.vmem [shape: f32[1,128], index: 2, kind: input, shape index: {}]
  %s3 = inlined_call_operand.vmem [shape: f32[1,128], index: 3, kind: input, shape index: {}]
  %s4 = inlined_call_operand.vmem [shape: f32[512,128], index: 4, kind: output, shape index: {}]
  %s5 = sld [smem:[#allocation0]]
  $region57: #{_lambda_.1} parent=0
    _
  %s7 = ssub.s32 1, %s5
  %s8 = scalar_select 0, %s7, %s5
  loop: start=0, step=1, limit=4
  $region2: #{_lambda_.1} parent=0 // loop_pre_header
    _
  $region3: #{_lambda_.1} parent=0 // loop_header
    %s10 = sphi 0, %s14
    %p11 = scmp.ge.s32.totalorder %s10, 4
    %s17 = sphi 0, %s36
    %s18 = sphi 0, %s32
    %s19 = sphi 0, %s28
    %s20 = sphi 0, %s17
    %s21 = sphi 0, %s18
    %s22 = sphi 0, %s19
    %s23 = sphi 0, %s20
    %s24 = sphi 0, %s21
    %s25 = sphi 0, %s22
    %s41 = sphi 0, %s43
    %s44 = sphi 0, %s41
    %s45 = sphi 0, %s44
    %s61 = sphi 0, %s45
    %s69 = sphi 0, %s71
    %s72 = sphi 0, %s69
    %s73 = sphi 0, %s72
    %s89 = sphi 0, %s73
    %s95 = sphi 0, %s97
    %s98 = sphi 0, %s95
    %s99 = sphi 0, %s98
    %s115 = sphi 0, %s99
    %s121 = sphi 0, %s123
    %s124 = sphi 0, %s121
    %s125 = sphi 0, %s124
    %s141 = sphi 0, %s125
    %s149 = sphi 0, %s151
    %s152 = sphi 0, %s149
    %s153 = sphi 0, %s152
    %s169 = sphi 0, %s153
  $region4: #{_lambda_.1} parent=0 // loop_header_branch
    %13 = sbr.rel (%p11) target = $region8
  $region5: #{_lambda_.1} parent=0 // loop_body
    %s15 = ssub.s32 %s10, 1
    %s16 = ssub.s32 %s10, 2
    %s26 = sadd.s32 1, %s19
    %p27 = scmp.ge.s32.totalorder %s26, 1
    %s28 = scalar_select %p27, 0, %s26
    %s29 = sadd.s32 1, %s18
    %s30 = scalar_select %p27, %s29, %s18
    %p31 = scmp.ge.s32.totalorder %s30, 1
    %s32 = scalar_select %p31, 0, %s30
    %s33 = sadd.s32 1, %s17
    %s34 = scalar_select %p31, %s33, %s17
    %p35 = scmp.ge.s32.totalorder %s34, 2
    %s36 = scalar_select %p35, 0, %s34
    %s37 = ssub.s32 %s17, %s36
    %s38 = ssub.s32 %s19, %s28
    %s39 = sor.u32 %s37, %s38
    %p40 = scmp.eq.s32.totalorder %s39, 0
    %s42 = sadd.s32 %s41, 1
    %s43 = scalar_select %p40, %s41, %s42
    %p46 = pneg %p40
    %p47 = scmp.eq.s32.totalorder %s10, 1
    %p48 = por %p46, %p47
    %p49 = scmp.ne.s32.totalorder %s41, %s44
    %p50 = scmp.eq.s32.totalorder %s10, 0
    %p51 = por %p49, %p50
    %p52 = scmp.ne.s32.totalorder %s41, %s44
    %p53 = scmp.eq.s32.totalorder %s15, 1
    %p54 = por %p52, %p53
    %p55 = scmp.ne.s32.totalorder %s44, %s45
    %p56 = scmp.eq.s32.totalorder %s15, 0
    %p57 = por %p55, %p56
    %p58 = scmp.ne.s32.totalorder %s44, %s45
    %p59 = scmp.eq.s32.totalorder %s16, 1
    %p60 = por %p58, %p59
    %p62 = scmp.ne.s32.totalorder %s45, %s61
    %p63 = scmp.eq.s32.totalorder %s16, 0
    %p64 = por %p62, %p63
    %s65 = ssub.s32 %s19, %s28
    %s66 = ssub.s32 %s18, %s32
    %s67 = sor.u32 %s65, %s66
    %p68 = scmp.eq.s32.totalorder %s67, 0
    %s70 = sadd.s32 %s69, 1
    %s71 = scalar_select %p68, %s69, %s70
    %p74 = pneg %p68
    %p75 = scmp.eq.s32.totalorder %s10, 1
    %p76 = por %p74, %p75
    %p77 = scmp.ne.s32.totalorder %s69, %s72
    %p78 = scmp.eq.s32.totalorder %s10, 0
    %p79 = por %p77, %p78
    %p80 = scmp.ne.s32.totalorder %s69, %s72
    %p81 = scmp.eq.s32.totalorder %s15, 1
    %p82 = por %p80, %p81
    %p83 = scmp.ne.s32.totalorder %s72, %s73
    %p84 = scmp.eq.s32.totalorder %s15, 0
    %p85 = por %p83, %p84
    %p86 = scmp.ne.s32.totalorder %s72, %s73
    %p87 = scmp.eq.s32.totalorder %s16, 1
    %p88 = por %p86, %p87
    %p90 = scmp.ne.s32.totalorder %s73, %s89
    %p91 = scmp.eq.s32.totalorder %s16, 0
    %p92 = por %p90, %p91
    %s93 = ssub.s32 %s18, %s32
    %p94 = scmp.eq.s32.totalorder %s93, 0
    %s96 = sadd.s32 %s95, 1
    %s97 = scalar_select %p94, %s95, %s96
    %p100 = pneg %p94
    %p101 = scmp.eq.s32.totalorder %s10, 1
    %p102 = por %p100, %p101
    %p103 = scmp.ne.s32.totalorder %s95, %s98
    %p104 = scmp.eq.s32.totalorder %s10, 0
    %p105 = por %p103, %p104
    %p106 = scmp.ne.s32.totalorder %s95, %s98
    %p107 = scmp.eq.s32.totalorder %s15, 1
    %p108 = por %p106, %p107
    %p109 = scmp.ne.s32.totalorder %s98, %s99
    %p110 = scmp.eq.s32.totalorder %s15, 0
    %p111 = por %p109, %p110
    %p112 = scmp.ne.s32.totalorder %s98, %s99
    %p113 = scmp.eq.s32.totalorder %s16, 1
    %p114 = por %p112, %p113
    %p116 = scmp.ne.s32.totalorder %s99, %s115
    %p117 = scmp.eq.s32.totalorder %s16, 0
    %p118 = por %p116, %p117
    %s119 = ssub.s32 %s18, %s32
    %p120 = scmp.eq.s32.totalorder %s119, 0
    %s122 = sadd.s32 %s121, 1
    %s123 = scalar_select %p120, %s121, %s122
    %p126 = pneg %p120
    %p127 = scmp.eq.s32.totalorder %s10, 1
    %p128 = por %p126, %p127
    %p129 = scmp.ne.s32.totalorder %s121, %s124
    %p130 = scmp.eq.s32.totalorder %s10, 0
    %p131 = por %p129, %p130
    %p132 = scmp.ne.s32.totalorder %s121, %s124
    %p133 = scmp.eq.s32.totalorder %s15, 1
    %p134 = por %p132, %p133
    %p135 = scmp.ne.s32.totalorder %s124, %s125
    %p136 = scmp.eq.s32.totalorder %s15, 0
    %p137 = por %p135, %p136
    %p138 = scmp.ne.s32.totalorder %s124, %s125
    %p139 = scmp.eq.s32.totalorder %s16, 1
    %p140 = por %p138, %p139
    %p142 = scmp.ne.s32.totalorder %s125, %s141
    %p143 = scmp.eq.s32.totalorder %s16, 0
    %p144 = por %p142, %p143
    %s145 = ssub.s32 %s17, %s36
    %s146 = ssub.s32 %s18, %s32
    %s147 = sor.u32 %s145, %s146
    %p148 = scmp.eq.s32.totalorder %s147, 0
    %s150 = sadd.s32 %s149, 1
    %s151 = scalar_select %p148, %s149, %s150
    %p154 = pneg %p148
    %p155 = scmp.eq.s32.totalorder %s10, 1
    %p156 = por %p154, %p155
    %p157 = scmp.ne.s32.totalorder %s149, %s152
    %p158 = scmp.eq.s32.totalorder %s10, 0
    %p159 = por %p157, %p158
    %p160 = scmp.ne.s32.totalorder %s149, %s152
    %p161 = scmp.eq.s32.totalorder %s15, 1
    %p162 = por %p160, %p161
    %p163 = scmp.ne.s32.totalorder %s152, %s153
    %p164 = scmp.eq.s32.totalorder %s15, 0
    %p165 = por %p163, %p164
    %p166 = scmp.ne.s32.totalorder %s152, %s153
    %p167 = scmp.eq.s32.totalorder %s16, 1
    %p168 = por %p166, %p167
    %p170 = scmp.ne.s32.totalorder %s153, %s169
    %p171 = scmp.eq.s32.totalorder %s16, 0
    %p172 = por %p170, %p171
    %p173 = scmp.le.s32.totalorder 1, %s10
    %p174 = scmp.lt.s32.totalorder %s10, 3
    %p175 = pnand %p173, %p174
    %p176 = pneg %p175
    // Predicated region
    $region9: #{_lambda_.1} parent=5 // pred_check
      _
    $region10: #{_lambda_.1} parent=5 // pred_check_branch
      %178 = sbr.rel (%p175) target = $region12
    $region11: #{_lambda_.1} parent=5 // pred_region
      %s179 = ssub.s32 %s10, 1
      // Predicated region
      $region13: #{_lambda_.1} parent=11 // pred_check
        %p180 = pneg %p85
      $region14: #{_lambda_.1} parent=11 // pred_check_branch
        %182 = sbr.rel (%p180) target = $region16
      $region15: #{_lambda_.1} parent=11 // pred_region
        %s183 = smul.u32 48, %s22
        %p184 = scmp.lt.s32.totalorder %s183, 47
        %s185 = scalar_select %p184, %s183, 47
        %p186 = scmp.lt.s32.totalorder %s21, 0
        %s187 = scalar_select %p186, %s21, 0
        %s188 = sadd.s32 %s187, %s185
        %s189 = smul.addr %s188, 4
        %s190 = scalar_lea.vmem %s1, %s189
        %s191 = smul.u32 48, %s22
      $region16: #{_lambda_.1} parent=11 // pred_fallthru
        _
      // Predicated region
      $region17: #{_lambda_.1} parent=11 // pred_check
        %p192 = pneg %p111
      $region18: #{_lambda_.1} parent=11 // pred_check_branch
        %194 = sbr.rel (%p192) target = $region20
      $region19: #{_lambda_.1} parent=11 // pred_region
        %p195 = scmp.lt.s32.totalorder %s21, 0
        %s196 = scalar_select %p195, %s21, 0
        %s197 = scalar_lea.vmem %s2, %s196
      $region20: #{_lambda_.1} parent=11 // pred_fallthru
        _
      // Predicated region
      $region21: #{_lambda_.1} parent=11 // pred_check
        %p198 = pneg %p137
      $region22: #{_lambda_.1} parent=11 // pred_check_branch
        %200 = sbr.rel (%p198) target = $region24
      $region23: #{_lambda_.1} parent=11 // pred_region
        %p201 = scmp.lt.s32.totalorder %s21, 0
        %s202 = scalar_select %p201, %s21, 0
        %s203 = scalar_lea.vmem %s3, %s202
      $region24: #{_lambda_.1} parent=11 // pred_fallthru
        _
    $region12: #{_lambda_.1} parent=5 // pred_fallthru
      _
    %p204 = scmp.lt.s32.totalorder %s10, 2
    // Predicated region
    $region25: #{_lambda_.1} parent=5 // pred_check
      %p205 = pneg %p204
    $region26: #{_lambda_.1} parent=5 // pred_check_branch
      %207 = sbr.rel (%p205) target = $region28
    $region27: #{_lambda_.1} parent=5 // pred_region
      // Predicated region
      $region29: #{_lambda_.1} parent=27 // pred_check
        %p208 = pneg %p51
      $region30: #{_lambda_.1} parent=27 // pred_check_branch
        %210 = sbr.rel (%p208) target = $region32
      $region31: #{_lambda_.1} parent=27 // pred_region
        %s211 = smul.u32 32, %s17
        %s212 = smul.u32 3, %s19
        %p213 = scmp.lt.s32.totalorder %s211, 63
        %s214 = scalar_select %p213, %s211, 63
        %p215 = scmp.lt.s32.totalorder %s212, 2
        %s216 = scalar_select %p215, %s212, 2
        %s217 = smul.addr %s214, 3
        %s218 = sadd.s32 %s216, %s217
        %s219 = smul.addr %s218, 4
        %s220 = scalar_lea.vmem %s0, %s219
        %s221 = smul.u32 32, %s17
        %s222 = smul.u32 3, %s19
      $region32: #{_lambda_.1} parent=27 // pred_fallthru
        _
    $region28: #{_lambda_.1} parent=5 // pred_fallthru
      _
    %p223 = scmp.le.s32.totalorder 1, %s10
    %p224 = scmp.lt.s32.totalorder %s10, 3
    %p225 = pnand %p223, %p224
    %p226 = pneg %p225
    // Predicated region
    $region33: #{_lambda_.1} parent=5 // pred_check
      _
    $region34: #{_lambda_.1} parent=5 // pred_check_branch
      %228 = sbr.rel (%p225) target = $region36
    $region35: #{_lambda_.1} parent=5 // pred_region
      %s229 = ssub.s32 %s10, 1
      %s230 = smul.u32 32, %s20
      %s231 = smul.u32 3, %s22
      %p232 = scmp.lt.s32.totalorder %s230, 63
      %s233 = scalar_select %p232, %s230, 63
      %p234 = scmp.lt.s32.totalorder %s231, 2
      %s235 = scalar_select %p234, %s231, 2
      %s236 = smul.addr %s233, 3
      %s237 = sadd.s32 %s235, %s236
      %s238 = smul.addr %s237, 4
      %s239 = scalar_lea.vmem %s0, %s238
      %p240 = pneg %p57
      %p241 = pneg %p54
      %s242 = smul.u32 48, %s22
      %p243 = scmp.lt.s32.totalorder %s242, 47
      %s244 = scalar_select %p243, %s242, 47
      %p245 = scmp.lt.s32.totalorder %s21, 0
      %s246 = scalar_select %p245, %s21, 0
      %s247 = sadd.s32 %s246, %s244
      %s248 = smul.addr %s247, 4
      %s249 = scalar_lea.vmem %s1, %s248
      %p250 = pneg %p85
      %p251 = pneg %p82
      %p252 = scmp.lt.s32.totalorder %s21, 0
      %s253 = scalar_select %p252, %s21, 0
      %s254 = scalar_lea.vmem %s2, %s253
      %p255 = pneg %p111
      %p256 = pneg %p108
      %p257 = scmp.lt.s32.totalorder %s21, 0
      %s258 = scalar_select %p257, %s21, 0
      %s259 = scalar_lea.vmem %s3, %s258
      %p260 = pneg %p137
      %p261 = pneg %p134
      %p262 = pneg %p165
      %p263 = pneg %p162
      %s264 = smul.u32 32, %s20
      %p265 = scmp.lt.s32.totalorder %s264, 63
      %s266 = scalar_select %p265, %s264, 63
      %p267 = scmp.lt.s32.totalorder %s21, 0
      %s268 = scalar_select %p267, %s21, 0
      %s269 = sadd.s32 %s268, %s266
      %s270 = smul.addr %s269, 8
      %s271 = scalar_lea.vmem %s4, %s270
      %s272 = smul.u32 32, %s20
      %s273 = smul.u32 3, %s22
      %p274 = scmp.lt.s32.totalorder %s272, 63
      %s275 = scalar_select %p274, %s272, 63
      %p276 = scmp.lt.s32.totalorder %s273, 2
      %s277 = scalar_select %p276, %s273, 2
      %s278 = smul.addr %s275, 3
      %s279 = sadd.s32 %s277, %s278
      %s280 = smul.addr %s279, 4
      %s281 = scalar_lea.vmem %s0, %s280
      %s282 = smul.u32 32, %s20
      %s283 = smul.u32 3, %s22
      %s284 = smul.u32 48, %s22
      %p285 = scmp.lt.s32.totalorder %s284, 47
      %s286 = scalar_select %p285, %s284, 47
      %p287 = scmp.lt.s32.totalorder %s21, 0
      %s288 = scalar_select %p287, %s21, 0
      %s289 = sadd.s32 %s288, %s286
      %s290 = smul.addr %s289, 4
      %s291 = scalar_lea.vmem %s1, %s290
      %s292 = smul.u32 48, %s22
      %p293 = scmp.lt.s32.totalorder %s21, 0
      %s294 = scalar_select %p293, %s21, 0
      %s295 = scalar_lea.vmem %s2, %s294
      %p296 = scmp.lt.s32.totalorder %s21, 0
      %s297 = scalar_select %p296, %s21, 0
      %s298 = scalar_lea.vmem %s3, %s297
      %s299 = smul.u32 32, %s20
      %p300 = scmp.lt.s32.totalorder %s299, 63
      %s301 = scalar_select %p300, %s299, 63
      %p302 = scmp.lt.s32.totalorder %s21, 0
      %s303 = scalar_select %p302, %s21, 0
      %s304 = sadd.s32 %s303, %s301
      %s305 = smul.addr %s304, 8
      %s306 = scalar_lea.vmem %s4, %s305
      %s307 = smul.u32 32, %s20
      %p308 = scmp.eq.s32.totalorder %s22, 0
      // Predicated region
      $region37: #{_lambda_.1} parent=35 // pred_check
        %p309 = pneg %p308
      $region38: #{_lambda_.1} parent=35 // pred_check_branch
        %311 = sbr.rel (%p309) target = $region40
      $region39: #{_lambda_.1} parent=35 // pred_region
        %312 = vst [vmem:[#allocation2] sm:$0xff] 0.0
        %313 = vst [vmem:[#allocation2 + $0x8] sm:$0xff] 0.0
        %314 = vst [vmem:[#allocation2 + $0x10] sm:$0xff] 0.0
        %315 = vst [vmem:[#allocation2 + $0x18] sm:$0xff] 0.0
        %316 = vst [vmem:[#allocation2 + $0x20] sm:$0xff] 0.0
        %317 = vst [vmem:[#allocation2 + $0x28] sm:$0xff] 0.0
        %318 = vst [vmem:[#allocation2 + $0x30] sm:$0xff] 0.0
        %319 = vst [vmem:[#allocation2 + $0x38] sm:$0xff] 0.0
        %320 = vst [vmem:[#allocation2 + $0x40] sm:$0xff] 0.0
        %321 = vst [vmem:[#allocation2 + $0x48] sm:$0xff] 0.0
        %322 = vst [vmem:[#allocation2 + $0x50] sm:$0xff] 0.0
        %323 = vst [vmem:[#allocation2 + $0x58] sm:$0xff] 0.0
        %324 = vst [vmem:[#allocation2 + $0x60] sm:$0xff] 0.0
        %325 = vst [vmem:[#allocation2 + $0x68] sm:$0xff] 0.0
        %326 = vst [vmem:[#allocation2 + $0x70] sm:$0xff] 0.0
        %327 = vst [vmem:[#allocation2 + $0x78] sm:$0xff] 0.0
        %328 = vst [vmem:[#allocation2 + $0x80] sm:$0xff] 0.0
        %329 = vst [vmem:[#allocation2 + $0x88] sm:$0xff] 0.0
        %330 = vst [vmem:[#allocation2 + $0x90] sm:$0xff] 0.0
        %331 = vst [vmem:[#allocation2 + $0x98] sm:$0xff] 0.0
        %332 = vst [vmem:[#allocation2 + $0xa0] sm:$0xff] 0.0
        %333 = vst [vmem:[#allocation2 + $0xa8] sm:$0xff] 0.0
        %334 = vst [vmem:[#allocation2 + $0xb0] sm:$0xff] 0.0
        %335 = vst [vmem:[#allocation2 + $0xb8] sm:$0xff] 0.0
        %336 = vst [vmem:[#allocation2 + $0xc0] sm:$0xff] 0.0
        %337 = vst [vmem:[#allocation2 + $0xc8] sm:$0xff] 0.0
        %338 = vst [vmem:[#allocation2 + $0xd0] sm:$0xff] 0.0
        %339 = vst [vmem:[#allocation2 + $0xd8] sm:$0xff] 0.0
        %340 = vst [vmem:[#allocation2 + $0xe0] sm:$0xff] 0.0
        %341 = vst [vmem:[#allocation2 + $0xe8] sm:$0xff] 0.0
        %342 = vst [vmem:[#allocation2 + $0xf0] sm:$0xff] 0.0
        %343 = vst [vmem:[#allocation2 + $0xf8] sm:$0xff] 0.0
      $region40: #{_lambda_.1} parent=35 // pred_fallthru
        _
      %v344 = vld [vmem:[#allocation2] sm:$0xff]
      %v345 = vld [vmem:[#allocation2 + $0x8] sm:$0xff]
      %v346 = vld [vmem:[#allocation2 + $0x10] sm:$0xff]
      %v347 = vld [vmem:[#allocation2 + $0x18] sm:$0xff]
      %v348 = vld [vmem:[#allocation2 + $0x20] sm:$0xff]
      %v349 = vld [vmem:[#allocation2 + $0x28] sm:$0xff]
      %v350 = vld [vmem:[#allocation2 + $0x30] sm:$0xff]
      %v351 = vld [vmem:[#allocation2 + $0x38] sm:$0xff]
      %v352 = vld [vmem:[#allocation2 + $0x40] sm:$0xff]
      %v353 = vld [vmem:[#allocation2 + $0x48] sm:$0xff]
      %v354 = vld [vmem:[#allocation2 + $0x50] sm:$0xff]
      %v355 = vld [vmem:[#allocation2 + $0x58] sm:$0xff]
      %v356 = vld [vmem:[#allocation2 + $0x60] sm:$0xff]
      %v357 = vld [vmem:[#allocation2 + $0x68] sm:$0xff]
      %v358 = vld [vmem:[#allocation2 + $0x70] sm:$0xff]
      %v359 = vld [vmem:[#allocation2 + $0x78] sm:$0xff]
      %v360 = vld [vmem:[#allocation2 + $0x80] sm:$0xff]
      %v361 = vld [vmem:[#allocation2 + $0x88] sm:$0xff]
      %v362 = vld [vmem:[#allocation2 + $0x90] sm:$0xff]
      %v363 = vld [vmem:[#allocation2 + $0x98] sm:$0xff]
      %v364 = vld [vmem:[#allocation2 + $0xa0] sm:$0xff]
      %v365 = vld [vmem:[#allocation2 + $0xa8] sm:$0xff]
      %v366 = vld [vmem:[#allocation2 + $0xb0] sm:$0xff]
      %v367 = vld [vmem:[#allocation2 + $0xb8] sm:$0xff]
      %v368 = vld [vmem:[#allocation2 + $0xc0] sm:$0xff]
      %v369 = vld [vmem:[#allocation2 + $0xc8] sm:$0xff]
      %v370 = vld [vmem:[#allocation2 + $0xd0] sm:$0xff]
      %v371 = vld [vmem:[#allocation2 + $0xd8] sm:$0xff]
      %v372 = vld [vmem:[#allocation2 + $0xe0] sm:$0xff]
      %v373 = vld [vmem:[#allocation2 + $0xe8] sm:$0xff]
      %v374 = vld [vmem:[#allocation2 + $0xf0] sm:$0xff]
      %v375 = vld [vmem:[#allocation2 + $0xf8] sm:$0xff]
      %v376 = vld [vmem:[%s281] sm:$0xff]
      %v377 = vld [vmem:[%s281 + $0x8] sm:$0xf]
      %v378 = vld [vmem:[%s281 + $0xc] sm:$0xff]
      %v379 = vld [vmem:[%s281 + $0x14] sm:$0xf]
      %v380 = vld [vmem:[%s281 + $0x18] sm:$0xff]
      %v381 = vld [vmem:[%s281 + $0x20] sm:$0xf]
      %v382 = vld [vmem:[%s281 + $0x24] sm:$0xff]
      %v383 = vld [vmem:[%s281 + $0x2c] sm:$0xf]
      %v384 = vld [vmem:[%s281 + $0x30] sm:$0xff]
      %v385 = vld [vmem:[%s281 + $0x38] sm:$0xf]
      %v386 = vld [vmem:[%s281 + $0x3c] sm:$0xff]
      %v387 = vld [vmem:[%s281 + $0x44] sm:$0xf]
      %v388 = vld [vmem:[%s281 + $0x48] sm:$0xff]
      %v389 = vld [vmem:[%s281 + $0x50] sm:$0xf]
      %v390 = vld [vmem:[%s281 + $0x54] sm:$0xff]
      %v391 = vld [vmem:[%s281 + $0x5c] sm:$0xf]
      %v392 = vld [vmem:[%s281 + $0x60] sm:$0xff]
      %v393 = vld [vmem:[%s281 + $0x68] sm:$0xf]
      %v394 = vld [vmem:[%s281 + $0x6c] sm:$0xff]
      %v395 = vld [vmem:[%s281 + $0x74] sm:$0xf]
      %v396 = vld [vmem:[%s281 + $0x78] sm:$0xff]
      %v397 = vld [vmem:[%s281 + $0x80] sm:$0xf]
      %v398 = vld [vmem:[%s281 + $0x84] sm:$0xff]
      %v399 = vld [vmem:[%s281 + $0x8c] sm:$0xf]
      %v400 = vld [vmem:[%s281 + $0x90] sm:$0xff]
      %v401 = vld [vmem:[%s281 + $0x98] sm:$0xf]
      %v402 = vld [vmem:[%s281 + $0x9c] sm:$0xff]
      %v403 = vld [vmem:[%s281 + $0xa4] sm:$0xf]
      %v404 = vld [vmem:[%s281 + $0xa8] sm:$0xff]
      %v405 = vld [vmem:[%s281 + $0xb0] sm:$0xf]
      %v406 = vld [vmem:[%s281 + $0xb4] sm:$0xff]
      %v407 = vld [vmem:[%s281 + $0xbc] sm:$0xf]
      %v408 = vld [vmem:[%s281 + $0xc0] sm:$0xff]
      %v409 = vld [vmem:[%s281 + $0xc8] sm:$0xf]
      %v410 = vld [vmem:[%s281 + $0xcc] sm:$0xff]
      %v411 = vld [vmem:[%s281 + $0xd4] sm:$0xf]
      %v412 = vld [vmem:[%s281 + $0xd8] sm:$0xff]
      %v413 = vld [vmem:[%s281 + $0xe0] sm:$0xf]
      %v414 = vld [vmem:[%s281 + $0xe4] sm:$0xff]
      %v415 = vld [vmem:[%s281 + $0xec] sm:$0xf]
      %v416 = vld [vmem:[%s281 + $0xf0] sm:$0xff]
      %v417 = vld [vmem:[%s281 + $0xf8] sm:$0xf]
      %v418 = vld [vmem:[%s281 + $0xfc] sm:$0xff]
      %v419 = vld [vmem:[%s281 + $0x104] sm:$0xf]
      %v420 = vld [vmem:[%s281 + $0x108] sm:$0xff]
      %v421 = vld [vmem:[%s281 + $0x110] sm:$0xf]
      %v422 = vld [vmem:[%s281 + $0x114] sm:$0xff]
      %v423 = vld [vmem:[%s281 + $0x11c] sm:$0xf]
      %v424 = vld [vmem:[%s281 + $0x120] sm:$0xff]
      %v425 = vld [vmem:[%s281 + $0x128] sm:$0xf]
      %v426 = vld [vmem:[%s281 + $0x12c] sm:$0xff]
      %v427 = vld [vmem:[%s281 + $0x134] sm:$0xf]
      %v428 = vld [vmem:[%s281 + $0x138] sm:$0xff]
      %v429 = vld [vmem:[%s281 + $0x140] sm:$0xf]
      %v430 = vld [vmem:[%s281 + $0x144] sm:$0xff]
      %v431 = vld [vmem:[%s281 + $0x14c] sm:$0xf]
      %v432 = vld [vmem:[%s281 + $0x150] sm:$0xff]
      %v433 = vld [vmem:[%s281 + $0x158] sm:$0xf]
      %v434 = vld [vmem:[%s281 + $0x15c] sm:$0xff]
      %v435 = vld [vmem:[%s281 + $0x164] sm:$0xf]
      %v436 = vld [vmem:[%s281 + $0x168] sm:$0xff]
      %v437 = vld [vmem:[%s281 + $0x170] sm:$0xf]
      %v438 = vld [vmem:[%s281 + $0x174] sm:$0xff]
      %v439 = vld [vmem:[%s281 + $0x17c] sm:$0xf]
      %v440 = vld [vmem:[%s291] sm:$0xf]
      %v441 = vld [vmem:[%s291 + $0x4] sm:$0xf]
      %v442 = vld [vmem:[%s291 + $0x8] sm:$0xf]
      %v443 = vld [vmem:[%s291 + $0xc] sm:$0xf]
      %v444 = vld [vmem:[%s291 + $0x10] sm:$0xf]
      %v445 = vld [vmem:[%s291 + $0x14] sm:$0xf]
      %v446 = vld [vmem:[%s291 + $0x18] sm:$0xf]
      %v447 = vld [vmem:[%s291 + $0x1c] sm:$0xf]
      %v448 = vld [vmem:[%s291 + $0x20] sm:$0xf]
      %v449 = vld [vmem:[%s291 + $0x24] sm:$0xf]
      %v450 = vld [vmem:[%s291 + $0x28] sm:$0xf]
      %v451 = vld [vmem:[%s291 + $0x2c] sm:$0xf]
      %v452 = vld [vmem:[%s291 + $0x30] sm:$0xf]
      %v453 = vld [vmem:[%s291 + $0x34] sm:$0xf]
      %v454 = vld [vmem:[%s291 + $0x38] sm:$0xf]
      %v455 = vld [vmem:[%s291 + $0x3c] sm:$0xf]
      %v456 = vld [vmem:[%s291 + $0x40] sm:$0xf]
      %v457 = vld [vmem:[%s291 + $0x44] sm:$0xf]
      %v458 = vld [vmem:[%s291 + $0x48] sm:$0xf]
      %v459 = vld [vmem:[%s291 + $0x4c] sm:$0xf]
      %v460 = vld [vmem:[%s291 + $0x50] sm:$0xf]
      %v461 = vld [vmem:[%s291 + $0x54] sm:$0xf]
      %v462 = vld [vmem:[%s291 + $0x58] sm:$0xf]
      %v463 = vld [vmem:[%s291 + $0x5c] sm:$0xf]
      %v464 = vld [vmem:[%s291 + $0x60] sm:$0xf]
      %v465 = vld [vmem:[%s291 + $0x64] sm:$0xf]
      %v466 = vld [vmem:[%s291 + $0x68] sm:$0xf]
      %v467 = vld [vmem:[%s291 + $0x6c] sm:$0xf]
      %v468 = vld [vmem:[%s291 + $0x70] sm:$0xf]
      %v469 = vld [vmem:[%s291 + $0x74] sm:$0xf]
      %v470 = vld [vmem:[%s291 + $0x78] sm:$0xf]
      %v471 = vld [vmem:[%s291 + $0x7c] sm:$0xf]
      %v472 = vld [vmem:[%s291 + $0x80] sm:$0xf]
      %v473 = vld [vmem:[%s291 + $0x84] sm:$0xf]
      %v474 = vld [vmem:[%s291 + $0x88] sm:$0xf]
      %v475 = vld [vmem:[%s291 + $0x8c] sm:$0xf]
      %v476 = vld [vmem:[%s291 + $0x90] sm:$0xf]
      %v477 = vld [vmem:[%s291 + $0x94] sm:$0xf]
      %v478 = vld [vmem:[%s291 + $0x98] sm:$0xf]
      %v479 = vld [vmem:[%s291 + $0x9c] sm:$0xf]
      %v480 = vld [vmem:[%s291 + $0xa0] sm:$0xf]
      %v481 = vld [vmem:[%s291 + $0xa4] sm:$0xf]
      %v482 = vld [vmem:[%s291 + $0xa8] sm:$0xf]
      %v483 = vld [vmem:[%s291 + $0xac] sm:$0xf]
      %v484 = vld [vmem:[%s291 + $0xb0] sm:$0xf]
      %v485 = vld [vmem:[%s291 + $0xb4] sm:$0xf]
      %v486 = vld [vmem:[%s291 + $0xb8] sm:$0xf]
      %v487 = vld [vmem:[%s291 + $0xbc] sm:$0xf]
      %v552 = vunpack.c.l.b16 %v376
      %v553 = vunpack.c.h.b16 %v376
      %v554 = vunpack.c.l.b16 %v377
      %v555 = vunpack.c.l.b16 %v378
      %v556 = vunpack.c.h.b16 %v378
      %v557 = vunpack.c.l.b16 %v379
      %v558 = vunpack.c.l.b16 %v380
      %v559 = vunpack.c.h.b16 %v380
      %v560 = vunpack.c.l.b16 %v381
      %v561 = vunpack.c.l.b16 %v382
      %v562 = vunpack.c.h.b16 %v382
      %v563 = vunpack.c.l.b16 %v383
      %v564 = vunpack.c.l.b16 %v384
      %v565 = vunpack.c.h.b16 %v384
      %v566 = vunpack.c.l.b16 %v385
      %v567 = vunpack.c.l.b16 %v386
      %v568 = vunpack.c.h.b16 %v386
      %v569 = vunpack.c.l.b16 %v387
      %v570 = vunpack.c.l.b16 %v388
      %v571 = vunpack.c.h.b16 %v388
      %v572 = vunpack.c.l.b16 %v389
      %v573 = vunpack.c.l.b16 %v390
      %v574 = vunpack.c.h.b16 %v390
      %v575 = vunpack.c.l.b16 %v391
      %v576 = vunpack.c.l.b16 %v392
      %v577 = vunpack.c.h.b16 %v392
      %v578 = vunpack.c.l.b16 %v393
      %v579 = vunpack.c.l.b16 %v394
      %v580 = vunpack.c.h.b16 %v394
      %v581 = vunpack.c.l.b16 %v395
      %v582 = vunpack.c.l.b16 %v396
      %v583 = vunpack.c.h.b16 %v396
      %v584 = vunpack.c.l.b16 %v397
      %v585 = vunpack.c.l.b16 %v398
      %v586 = vunpack.c.h.b16 %v398
      %v587 = vunpack.c.l.b16 %v399
      %v588 = vunpack.c.l.b16 %v400
      %v589 = vunpack.c.h.b16 %v400
      %v590 = vunpack.c.l.b16 %v401
      %v591 = vunpack.c.l.b16 %v402
      %v592 = vunpack.c.h.b16 %v402
      %v593 = vunpack.c.l.b16 %v403
      %v594 = vunpack.c.l.b16 %v404
      %v595 = vunpack.c.h.b16 %v404
      %v596 = vunpack.c.l.b16 %v405
      %v597 = vunpack.c.l.b16 %v406
      %v598 = vunpack.c.h.b16 %v406
      %v599 = vunpack.c.l.b16 %v407
      %v600 = vunpack.c.l.b16 %v408
      %v601 = vunpack.c.h.b16 %v408
      %v602 = vunpack.c.l.b16 %v409
      %v603 = vunpack.c.l.b16 %v410
      %v604 = vunpack.c.h.b16 %v410
      %v605 = vunpack.c.l.b16 %v411
      %v606 = vunpack.c.l.b16 %v412
      %v607 = vunpack.c.h.b16 %v412
      %v608 = vunpack.c.l.b16 %v413
      %v609 = vunpack.c.l.b16 %v414
      %v610 = vunpack.c.h.b16 %v414
      %v611 = vunpack.c.l.b16 %v415
      %v612 = vunpack.c.l.b16 %v416
      %v613 = vunpack.c.h.b16 %v416
      %v614 = vunpack.c.l.b16 %v417
      %v615 = vunpack.c.l.b16 %v418
      %v616 = vunpack.c.h.b16 %v418
      %v617 = vunpack.c.l.b16 %v419
      %v618 = vunpack.c.l.b16 %v420
      %v619 = vunpack.c.h.b16 %v420
      %v620 = vunpack.c.l.b16 %v421
      %v621 = vunpack.c.l.b16 %v422
      %v622 = vunpack.c.h.b16 %v422
      %v623 = vunpack.c.l.b16 %v423
      %v624 = vunpack.c.l.b16 %v424
      %v625 = vunpack.c.h.b16 %v424
      %v626 = vunpack.c.l.b16 %v425
      %v627 = vunpack.c.l.b16 %v426
      %v628 = vunpack.c.h.b16 %v426
      %v629 = vunpack.c.l.b16 %v427
      %v630 = vunpack.c.l.b16 %v428
      %v631 = vunpack.c.h.b16 %v428
      %v632 = vunpack.c.l.b16 %v429
      %v633 = vunpack.c.l.b16 %v430
      %v634 = vunpack.c.h.b16 %v430
      %v635 = vunpack.c.l.b16 %v431
      %v636 = vunpack.c.l.b16 %v432
      %v637 = vunpack.c.h.b16 %v432
      %v638 = vunpack.c.l.b16 %v433
      %v639 = vunpack.c.l.b16 %v434
      %v640 = vunpack.c.h.b16 %v434
      %v641 = vunpack.c.l.b16 %v435
      %v642 = vunpack.c.l.b16 %v436
      %v643 = vunpack.c.h.b16 %v436
      %v644 = vunpack.c.l.b16 %v437
      %v645 = vunpack.c.l.b16 %v438
      %v646 = vunpack.c.h.b16 %v438
      %v647 = vunpack.c.l.b16 %v439
      %v648 = vpack.c.b16 %v555, %v552
      %v649 = vpack.c.b16 %v556, %v553
      %v650 = vpack.c.b16 %v557, %v554
      %v651 = vpack.c.b16 %v561, %v558
      %v652 = vpack.c.b16 %v562, %v559
      %v653 = vpack.c.b16 %v563, %v560
      %v654 = vpack.c.b16 %v567, %v564
      %v655 = vpack.c.b16 %v568, %v565
      %v656 = vpack.c.b16 %v569, %v566
      %v657 = vpack.c.b16 %v573, %v570
      %v658 = vpack.c.b16 %v574, %v571
      %v659 = vpack.c.b16 %v575, %v572
      %v660 = vpack.c.b16 %v579, %v576
      %v661 = vpack.c.b16 %v580, %v577
      %v662 = vpack.c.b16 %v581, %v578
      %v663 = vpack.c.b16 %v585, %v582
      %v664 = vpack.c.b16 %v586, %v583
      %v665 = vpack.c.b16 %v587, %v584
      %v666 = vpack.c.b16 %v591, %v588
      %v667 = vpack.c.b16 %v592, %v589
      %v668 = vpack.c.b16 %v593, %v590
      %v669 = vpack.c.b16 %v597, %v594
      %v670 = vpack.c.b16 %v598, %v595
      %v671 = vpack.c.b16 %v599, %v596
      %v672 = vpack.c.b16 %v603, %v600
      %v673 = vpack.c.b16 %v604, %v601
      %v674 = vpack.c.b16 %v605, %v602
      %v675 = vpack.c.b16 %v609, %v606
      %v676 = vpack.c.b16 %v610, %v607
      %v677 = vpack.c.b16 %v611, %v608
      %v678 = vpack.c.b16 %v615, %v612
      %v679 = vpack.c.b16 %v616, %v613
      %v680 = vpack.c.b16 %v617, %v614
      %v681 = vpack.c.b16 %v621, %v618
      %v682 = vpack.c.b16 %v622, %v619
      %v683 = vpack.c.b16 %v623, %v620
      %v684 = vpack.c.b16 %v627, %v624
      %v685 = vpack.c.b16 %v628, %v625
      %v686 = vpack.c.b16 %v629, %v626
      %v687 = vpack.c.b16 %v633, %v630
      %v688 = vpack.c.b16 %v634, %v631
      %v689 = vpack.c.b16 %v635, %v632
      %v690 = vpack.c.b16 %v639, %v636
      %v691 = vpack.c.b16 %v640, %v637
      %v692 = vpack.c.b16 %v641, %v638
      %v693 = vpack.c.b16 %v645, %v642
      %v694 = vpack.c.b16 %v646, %v643
      %v695 = vpack.c.b16 %v647, %v644
      %v792 = vunpack.c.l.b16 %v440
      %v793 = vunpack.c.l.b16 %v441
      %v794 = vunpack.c.l.b16 %v442
      %v795 = vunpack.c.l.b16 %v443
      %v796 = vunpack.c.l.b16 %v444
      %v797 = vunpack.c.l.b16 %v445
      %v798 = vunpack.c.l.b16 %v446
      %v799 = vunpack.c.l.b16 %v447
      %v800 = vunpack.c.l.b16 %v448
      %v801 = vunpack.c.l.b16 %v449
      %v802 = vunpack.c.l.b16 %v450
      %v803 = vunpack.c.l.b16 %v451
      %v804 = vunpack.c.l.b16 %v452
      %v805 = vunpack.c.l.b16 %v453
      %v806 = vunpack.c.l.b16 %v454
      %v807 = vunpack.c.l.b16 %v455
      %v808 = vunpack.c.l.b16 %v456
      %v809 = vunpack.c.l.b16 %v457
      %v810 = vunpack.c.l.b16 %v458
      %v811 = vunpack.c.l.b16 %v459
      %v812 = vunpack.c.l.b16 %v460
      %v813 = vunpack.c.l.b16 %v461
      %v814 = vunpack.c.l.b16 %v462
      %v815 = vunpack.c.l.b16 %v463
      %v816 = vunpack.c.l.b16 %v464
      %v817 = vunpack.c.l.b16 %v465
      %v818 = vunpack.c.l.b16 %v466
      %v819 = vunpack.c.l.b16 %v467
      %v820 = vunpack.c.l.b16 %v468
      %v821 = vunpack.c.l.b16 %v469
      %v822 = vunpack.c.l.b16 %v470
      %v823 = vunpack.c.l.b16 %v471
      %v824 = vunpack.c.l.b16 %v472
      %v825 = vunpack.c.l.b16 %v473
      %v826 = vunpack.c.l.b16 %v474
      %v827 = vunpack.c.l.b16 %v475
      %v828 = vunpack.c.l.b16 %v476
      %v829 = vunpack.c.l.b16 %v477
      %v830 = vunpack.c.l.b16 %v478
      %v831 = vunpack.c.l.b16 %v479
      %v832 = vunpack.c.l.b16 %v480
      %v833 = vunpack.c.l.b16 %v481
      %v834 = vunpack.c.l.b16 %v482
      %v835 = vunpack.c.l.b16 %v483
      %v836 = vunpack.c.l.b16 %v484
      %v837 = vunpack.c.l.b16 %v485
      %v838 = vunpack.c.l.b16 %v486
      %v839 = vunpack.c.l.b16 %v487
      %v840 = vpack.c.b16 %v793, %v792
      %v841 = vpack.c.b16 %v795, %v794
      %v842 = vpack.c.b16 %v797, %v796
      %v843 = vpack.c.b16 %v799, %v798
      %v844 = vpack.c.b16 %v801, %v800
      %v845 = vpack.c.b16 %v803, %v802
      %v846 = vpack.c.b16 %v805, %v804
      %v847 = vpack.c.b16 %v807, %v806
      %v848 = vpack.c.b16 %v809, %v808
      %v849 = vpack.c.b16 %v811, %v810
      %v850 = vpack.c.b16 %v813, %v812
      %v851 = vpack.c.b16 %v815, %v814
      %v852 = vpack.c.b16 %v817, %v816
      %v853 = vpack.c.b16 %v819, %v818
      %v854 = vpack.c.b16 %v821, %v820
      %v855 = vpack.c.b16 %v823, %v822
      %v856 = vpack.c.b16 %v825, %v824
      %v857 = vpack.c.b16 %v827, %v826
      %v858 = vpack.c.b16 %v829, %v828
      %v859 = vpack.c.b16 %v831, %v830
      %v860 = vpack.c.b16 %v833, %v832
      %v861 = vpack.c.b16 %v835, %v834
      %v862 = vpack.c.b16 %v837, %v836
      %v863 = vpack.c.b16 %v839, %v838
      %888 = vmatpush.bf16.msra.mxu0 %v847
      %889 = vmatpush.bf16.msra.mxu0 %v846
      %890 = vmatpush.bf16.msra.mxu0 %v845
      %891 = vmatpush.bf16.msra.mxu0 %v844
      %892 = vmatpush.bf16.msra.mxu0 %v843
      %893 = vmatpush.bf16.msra.mxu0 %v842
      %894 = vmatpush.bf16.msra.mxu0 %v841
      %895 = vmatpush.bf16.msra.mxu0 %v840
      %896 = vmatmul.bf16.gmra.mxu0 %v648
      %v897 = vpop.f32.mrf.mxu0
      %v898 = vadd.f32 0.0, %v897
      %v899 = vpop.f32.mrf.mxu0
      %v900 = vadd.f32 0.0, %v899
      %901 = vmatmul.bf16.gmra.mxu0 %v651
      %v902 = vpop.f32.mrf.mxu0
      %v903 = vadd.f32 0.0, %v902
      %v904 = vpop.f32.mrf.mxu0
      %v905 = vadd.f32 0.0, %v904
      %906 = vmatmul.bf16.gmra.mxu0 %v654
      %v907 = vpop.f32.mrf.mxu0
      %v908 = vadd.f32 0.0, %v907
      %v909 = vpop.f32.mrf.mxu0
      %v910 = vadd.f32 0.0, %v909
      %911 = vmatmul.bf16.gmra.mxu0 %v657
      %v912 = vpop.f32.mrf.mxu0
      %v913 = vadd.f32 0.0, %v912
      %v914 = vpop.f32.mrf.mxu0
      %v915 = vadd.f32 0.0, %v914
      %916 = vmatmul.bf16.gmra.mxu0 %v660
      %v917 = vpop.f32.mrf.mxu0
      %v918 = vadd.f32 0.0, %v917
      %v919 = vpop.f32.mrf.mxu0
      %v920 = vadd.f32 0.0, %v919
      %921 = vmatmul.bf16.gmra.mxu0 %v663
      %v922 = vpop.f32.mrf.mxu0
      %v923 = vadd.f32 0.0, %v922
      %v924 = vpop.f32.mrf.mxu0
      %v925 = vadd.f32 0.0, %v924
      %926 = vmatmul.bf16.gmra.mxu0 %v666
      %v927 = vpop.f32.mrf.mxu0
      %v928 = vadd.f32 0.0, %v927
      %v929 = vpop.f32.mrf.mxu0
      %v930 = vadd.f32 0.0, %v929
      %931 = vmatmul.bf16.gmra.mxu0 %v669
      %v932 = vpop.f32.mrf.mxu0
      %v933 = vadd.f32 0.0, %v932
      %v934 = vpop.f32.mrf.mxu0
      %v935 = vadd.f32 0.0, %v934
      %936 = vmatmul.bf16.gmra.mxu0 %v672
      %v937 = vpop.f32.mrf.mxu0
      %v938 = vadd.f32 0.0, %v937
      %v939 = vpop.f32.mrf.mxu0
      %v940 = vadd.f32 0.0, %v939
      %941 = vmatmul.bf16.gmra.mxu0 %v675
      %v942 = vpop.f32.mrf.mxu0
      %v943 = vadd.f32 0.0, %v942
      %v944 = vpop.f32.mrf.mxu0
      %v945 = vadd.f32 0.0, %v944
      %946 = vmatmul.bf16.gmra.mxu0 %v678
      %v947 = vpop.f32.mrf.mxu0
      %v948 = vadd.f32 0.0, %v947
      %v949 = vpop.f32.mrf.mxu0
      %v950 = vadd.f32 0.0, %v949
      %951 = vmatmul.bf16.gmra.mxu0 %v681
      %v952 = vpop.f32.mrf.mxu0
      %v953 = vadd.f32 0.0, %v952
      %v954 = vpop.f32.mrf.mxu0
      %v955 = vadd.f32 0.0, %v954
      %956 = vmatmul.bf16.gmra.mxu0 %v684
      %v957 = vpop.f32.mrf.mxu0
      %v958 = vadd.f32 0.0, %v957
      %v959 = vpop.f32.mrf.mxu0
      %v960 = vadd.f32 0.0, %v959
      %961 = vmatmul.bf16.gmra.mxu0 %v687
      %v962 = vpop.f32.mrf.mxu0
      %v963 = vadd.f32 0.0, %v962
      %v964 = vpop.f32.mrf.mxu0
      %v965 = vadd.f32 0.0, %v964
      %966 = vmatmul.bf16.gmra.mxu0 %v690
      %v967 = vpop.f32.mrf.mxu0
      %v968 = vadd.f32 0.0, %v967
      %v969 = vpop.f32.mrf.mxu0
      %v970 = vadd.f32 0.0, %v969
      %971 = vmatmul.bf16.gmra.mxu0 %v693
      %v972 = vpop.f32.mrf.mxu0
      %v973 = vadd.f32 0.0, %v972
      %v974 = vpop.f32.mrf.mxu0
      %v975 = vadd.f32 0.0, %v974
      %976 = vdwg.mxu0
      %977 = vmatpush.bf16.msra.mxu0 %v855
      %978 = vmatpush.bf16.msra.mxu0 %v854
      %979 = vmatpush.bf16.msra.mxu0 %v853
      %980 = vmatpush.bf16.msra.mxu0 %v852
      %981 = vmatpush.bf16.msra.mxu0 %v851
      %982 = vmatpush.bf16.msra.mxu0 %v850
      %983 = vmatpush.bf16.msra.mxu0 %v849
      %984 = vmatpush.bf16.msra.mxu0 %v848
      %985 = vmatmul.bf16.gmra.mxu0 %v649
      %v986 = vpop.f32.mrf.mxu0
      %v987 = vadd.f32 %v898, %v986
      %v988 = vpop.f32.mrf.mxu0
      %v989 = vadd.f32 %v900, %v988
      %990 = vmatmul.bf16.gmra.mxu0 %v652
      %v991 = vpop.f32.mrf.mxu0
      %v992 = vadd.f32 %v903, %v991
      %v993 = vpop.f32.mrf.mxu0
      %v994 = vadd.f32 %v905, %v993
      %995 = vmatmul.bf16.gmra.mxu0 %v655
      %v996 = vpop.f32.mrf.mxu0
      %v997 = vadd.f32 %v908, %v996
      %v998 = vpop.f32.mrf.mxu0
      %v999 = vadd.f32 %v910, %v998
      %1000 = vmatmul.bf16.gmra.mxu0 %v658
      %v1001 = vpop.f32.mrf.mxu0
      %v1002 = vadd.f32 %v913, %v1001
      %v1003 = vpop.f32.mrf.mxu0
      %v1004 = vadd.f32 %v915, %v1003
      %1005 = vmatmul.bf16.gmra.mxu0 %v661
      %v1006 = vpop.f32.mrf.mxu0
      %v1007 = vadd.f32 %v918, %v1006
      %v1008 = vpop.f32.mrf.mxu0
      %v1009 = vadd.f32 %v920, %v1008
      %1010 = vmatmul.bf16.gmra.mxu0 %v664
      %v1011 = vpop.f32.mrf.mxu0
      %v1012 = vadd.f32 %v923, %v1011
      %v1013 = vpop.f32.mrf.mxu0
      %v1014 = vadd.f32 %v925, %v1013
      %1015 = vmatmul.bf16.gmra.mxu0 %v667
      %v1016 = vpop.f32.mrf.mxu0
      %v1017 = vadd.f32 %v928, %v1016
      %v1018 = vpop.f32.mrf.mxu0
      %v1019 = vadd.f32 %v930, %v1018
      %1020 = vmatmul.bf16.gmra.mxu0 %v670
      %v1021 = vpop.f32.mrf.mxu0
      %v1022 = vadd.f32 %v933, %v1021
      %v1023 = vpop.f32.mrf.mxu0
      %v1024 = vadd.f32 %v935, %v1023
      %1025 = vmatmul.bf16.gmra.mxu0 %v673
      %v1026 = vpop.f32.mrf.mxu0
      %v1027 = vadd.f32 %v938, %v1026
      %v1028 = vpop.f32.mrf.mxu0
      %v1029 = vadd.f32 %v940, %v1028
      %1030 = vmatmul.bf16.gmra.mxu0 %v676
      %v1031 = vpop.f32.mrf.mxu0
      %v1032 = vadd.f32 %v943, %v1031
      %v1033 = vpop.f32.mrf.mxu0
      %v1034 = vadd.f32 %v945, %v1033
      %1035 = vmatmul.bf16.gmra.mxu0 %v679
      %v1036 = vpop.f32.mrf.mxu0
      %v1037 = vadd.f32 %v948, %v1036
      %v1038 = vpop.f32.mrf.mxu0
      %v1039 = vadd.f32 %v950, %v1038
      %1040 = vmatmul.bf16.gmra.mxu0 %v682
      %v1041 = vpop.f32.mrf.mxu0
      %v1042 = vadd.f32 %v953, %v1041
      %v1043 = vpop.f32.mrf.mxu0
      %v1044 = vadd.f32 %v955, %v1043
      %1045 = vmatmul.bf16.gmra.mxu0 %v685
      %v1046 = vpop.f32.mrf.mxu0
      %v1047 = vadd.f32 %v958, %v1046
      %v1048 = vpop.f32.mrf.mxu0
      %v1049 = vadd.f32 %v960, %v1048
      %1050 = vmatmul.bf16.gmra.mxu0 %v688
      %v1051 = vpop.f32.mrf.mxu0
      %v1052 = vadd.f32 %v963, %v1051
      %v1053 = vpop.f32.mrf.mxu0
      %v1054 = vadd.f32 %v965, %v1053
      %1055 = vmatmul.bf16.gmra.mxu0 %v691
      %v1056 = vpop.f32.mrf.mxu0
      %v1057 = vadd.f32 %v968, %v1056
      %v1058 = vpop.f32.mrf.mxu0
      %v1059 = vadd.f32 %v970, %v1058
      %1060 = vmatmul.bf16.gmra.mxu0 %v694
      %v1061 = vpop.f32.mrf.mxu0
      %v1062 = vadd.f32 %v973, %v1061
      %v1063 = vpop.f32.mrf.mxu0
      %v1064 = vadd.f32 %v975, %v1063
      %1065 = vdwg.mxu0
      %1066 = vmatpush.bf16.msra.mxu0 %v863
      %1067 = vmatpush.bf16.msra.mxu0 %v862
      %1068 = vmatpush.bf16.msra.mxu0 %v861
      %1069 = vmatpush.bf16.msra.mxu0 %v860
      %1070 = vmatpush.bf16.msra.mxu0 %v859
      %1071 = vmatpush.bf16.msra.mxu0 %v858
      %1072 = vmatpush.bf16.msra.mxu0 %v857
      %1073 = vmatpush.bf16.msra.mxu0 %v856
      %1074 = vmatmul.bf16.gmra.mxu0 %v650
      %v1075 = vpop.f32.mrf.mxu0
      %v1076 = vadd.f32 %v987, %v1075
      %v1077 = vpop.f32.mrf.mxu0
      %v1078 = vadd.f32 %v989, %v1077
      %1079 = vmatmul.bf16.gmra.mxu0 %v653
      %v1080 = vpop.f32.mrf.mxu0
      %v1081 = vadd.f32 %v992, %v1080
      %v1082 = vpop.f32.mrf.mxu0
      %v1083 = vadd.f32 %v994, %v1082
      %1084 = vmatmul.bf16.gmra.mxu0 %v656
      %v1085 = vpop.f32.mrf.mxu0
      %v1086 = vadd.f32 %v997, %v1085
      %v1087 = vpop.f32.mrf.mxu0
      %v1088 = vadd.f32 %v999, %v1087
      %1089 = vmatmul.bf16.gmra.mxu0 %v659
      %v1090 = vpop.f32.mrf.mxu0
      %v1091 = vadd.f32 %v1002, %v1090
      %v1092 = vpop.f32.mrf.mxu0
      %v1093 = vadd.f32 %v1004, %v1092
      %1094 = vmatmul.bf16.gmra.mxu0 %v662
      %v1095 = vpop.f32.mrf.mxu0
      %v1096 = vadd.f32 %v1007, %v1095
      %v1097 = vpop.f32.mrf.mxu0
      %v1098 = vadd.f32 %v1009, %v1097
      %1099 = vmatmul.bf16.gmra.mxu0 %v665
      %v1100 = vpop.f32.mrf.mxu0
      %v1101 = vadd.f32 %v1012, %v1100
      %v1102 = vpop.f32.mrf.mxu0
      %v1103 = vadd.f32 %v1014, %v1102
      %1104 = vmatmul.bf16.gmra.mxu0 %v668
      %v1105 = vpop.f32.mrf.mxu0
      %v1106 = vadd.f32 %v1017, %v1105
      %v1107 = vpop.f32.mrf.mxu0
      %v1108 = vadd.f32 %v1019, %v1107
      %1109 = vmatmul.bf16.gmra.mxu0 %v671
      %v1110 = vpop.f32.mrf.mxu0
      %v1111 = vadd.f32 %v1022, %v1110
      %v1112 = vpop.f32.mrf.mxu0
      %v1113 = vadd.f32 %v1024, %v1112
      %1114 = vmatmul.bf16.gmra.mxu0 %v674
      %v1115 = vpop.f32.mrf.mxu0
      %v1116 = vadd.f32 %v1027, %v1115
      %v1117 = vpop.f32.mrf.mxu0
      %v1118 = vadd.f32 %v1029, %v1117
      %1119 = vmatmul.bf16.gmra.mxu0 %v677
      %v1120 = vpop.f32.mrf.mxu0
      %v1121 = vadd.f32 %v1032, %v1120
      %v1122 = vpop.f32.mrf.mxu0
      %v1123 = vadd.f32 %v1034, %v1122
      %1124 = vmatmul.bf16.gmra.mxu0 %v680
      %v1125 = vpop.f32.mrf.mxu0
      %v1126 = vadd.f32 %v1037, %v1125
      %v1127 = vpop.f32.mrf.mxu0
      %v1128 = vadd.f32 %v1039, %v1127
      %1129 = vmatmul.bf16.gmra.mxu0 %v683
      %v1130 = vpop.f32.mrf.mxu0
      %v1131 = vadd.f32 %v1042, %v1130
      %v1132 = vpop.f32.mrf.mxu0
      %v1133 = vadd.f32 %v1044, %v1132
      %1134 = vmatmul.bf16.gmra.mxu0 %v686
      %v1135 = vpop.f32.mrf.mxu0
      %v1136 = vadd.f32 %v1047, %v1135
      %v1137 = vpop.f32.mrf.mxu0
      %v1138 = vadd.f32 %v1049, %v1137
      %1139 = vmatmul.bf16.gmra.mxu0 %v689
      %v1140 = vpop.f32.mrf.mxu0
      %v1141 = vadd.f32 %v1052, %v1140
      %v1142 = vpop.f32.mrf.mxu0
      %v1143 = vadd.f32 %v1054, %v1142
      %1144 = vmatmul.bf16.gmra.mxu0 %v692
      %v1145 = vpop.f32.mrf.mxu0
      %v1146 = vadd.f32 %v1057, %v1145
      %v1147 = vpop.f32.mrf.mxu0
      %v1148 = vadd.f32 %v1059, %v1147
      %1149 = vmatmul.bf16.gmra.mxu0 %v695
      %v1150 = vpop.f32.mrf.mxu0
      %v1151 = vadd.f32 %v1062, %v1150
      %v1152 = vpop.f32.mrf.mxu0
      %v1153 = vadd.f32 %v1064, %v1152
      %1154 = vdwg.mxu0
      %v1155 = vadd.f32 %v344, %v1076
      %v1156 = vadd.f32 %v345, %v1078
      %v1157 = vadd.f32 %v346, %v1081
      %v1158 = vadd.f32 %v347, %v1083
      %v1159 = vadd.f32 %v348, %v1086
      %v1160 = vadd.f32 %v349, %v1088
      %v1161 = vadd.f32 %v350, %v1091
      %v1162 = vadd.f32 %v351, %v1093
      %v1163 = vadd.f32 %v352, %v1096
      %v1164 = vadd.f32 %v353, %v1098
      %v1165 = vadd.f32 %v354, %v1101
      %v1166 = vadd.f32 %v355, %v1103
      %v1167 = vadd.f32 %v356, %v1106
      %v1168 = vadd.f32 %v357, %v1108
      %v1169 = vadd.f32 %v358, %v1111
      %v1170 = vadd.f32 %v359, %v1113
      %v1171 = vadd.f32 %v360, %v1116
      %v1172 = vadd.f32 %v361, %v1118
      %v1173 = vadd.f32 %v362, %v1121
      %v1174 = vadd.f32 %v363, %v1123
      %v1175 = vadd.f32 %v364, %v1126
      %v1176 = vadd.f32 %v365, %v1128
      %v1177 = vadd.f32 %v366, %v1131
      %v1178 = vadd.f32 %v367, %v1133
      %v1179 = vadd.f32 %v368, %v1136
      %v1180 = vadd.f32 %v369, %v1138
      %v1181 = vadd.f32 %v370, %v1141
      %v1182 = vadd.f32 %v371, %v1143
      %v1183 = vadd.f32 %v372, %v1146
      %v1184 = vadd.f32 %v373, %v1148
      %v1185 = vadd.f32 %v374, %v1151
      %v1186 = vadd.f32 %v375, %v1153
      %1187 = vst [vmem:[#allocation2] sm:$0xff] %v1155
      %1188 = vst [vmem:[#allocation2 + $0x8] sm:$0xff] %v1156
      %1189 = vst [vmem:[#allocation2 + $0x10] sm:$0xff] %v1157
      %1190 = vst [vmem:[#allocation2 + $0x18] sm:$0xff] %v1158
      %1191 = vst [vmem:[#allocation2 + $0x20] sm:$0xff] %v1159
      %1192 = vst [vmem:[#allocation2 + $0x28] sm:$0xff] %v1160
      %1193 = vst [vmem:[#allocation2 + $0x30] sm:$0xff] %v1161
      %1194 = vst [vmem:[#allocation2 + $0x38] sm:$0xff] %v1162
      %1195 = vst [vmem:[#allocation2 + $0x40] sm:$0xff] %v1163
      %1196 = vst [vmem:[#allocation2 + $0x48] sm:$0xff] %v1164
      %1197 = vst [vmem:[#allocation2 + $0x50] sm:$0xff] %v1165
      %1198 = vst [vmem:[#allocation2 + $0x58] sm:$0xff] %v1166
      %1199 = vst [vmem:[#allocation2 + $0x60] sm:$0xff] %v1167
      %1200 = vst [vmem:[#allocation2 + $0x68] sm:$0xff] %v1168
      %1201 = vst [vmem:[#allocation2 + $0x70] sm:$0xff] %v1169
      %1202 = vst [vmem:[#allocation2 + $0x78] sm:$0xff] %v1170
      %1203 = vst [vmem:[#allocation2 + $0x80] sm:$0xff] %v1171
      %1204 = vst [vmem:[#allocation2 + $0x88] sm:$0xff] %v1172
      %1205 = vst [vmem:[#allocation2 + $0x90] sm:$0xff] %v1173
      %1206 = vst [vmem:[#allocation2 + $0x98] sm:$0xff] %v1174
      %1207 = vst [vmem:[#allocation2 + $0xa0] sm:$0xff] %v1175
      %1208 = vst [vmem:[#allocation2 + $0xa8] sm:$0xff] %v1176
      %1209 = vst [vmem:[#allocation2 + $0xb0] sm:$0xff] %v1177
      %1210 = vst [vmem:[#allocation2 + $0xb8] sm:$0xff] %v1178
      %1211 = vst [vmem:[#allocation2 + $0xc0] sm:$0xff] %v1179
      %1212 = vst [vmem:[#allocation2 + $0xc8] sm:$0xff] %v1180
      %1213 = vst [vmem:[#allocation2 + $0xd0] sm:$0xff] %v1181
      %1214 = vst [vmem:[#allocation2 + $0xd8] sm:$0xff] %v1182
      %1215 = vst [vmem:[#allocation2 + $0xe0] sm:$0xff] %v1183
      %1216 = vst [vmem:[#allocation2 + $0xe8] sm:$0xff] %v1184
      %1217 = vst [vmem:[#allocation2 + $0xf0] sm:$0xff] %v1185
      %1218 = vst [vmem:[#allocation2 + $0xf8] sm:$0xff] %v1186
      // Predicated region
      $region41: #{_lambda_.1} parent=35 // pred_check
        %p1219 = pneg %p308
      $region42: #{_lambda_.1} parent=35 // pred_check_branch
        %1221 = sbr.rel (%p1219) target = $region44
      $region43: #{_lambda_.1} parent=35 // pred_region
        %v1222 = vld [vmem:[#allocation2] sm:$0xff]
        %v1223 = vld [vmem:[#allocation2 + $0x8] sm:$0xff]
        %v1224 = vld [vmem:[#allocation2 + $0x10] sm:$0xff]
        %v1225 = vld [vmem:[#allocation2 + $0x18] sm:$0xff]
        %v1226 = vld [vmem:[#allocation2 + $0x20] sm:$0xff]
        %v1227 = vld [vmem:[#allocation2 + $0x28] sm:$0xff]
        %v1228 = vld [vmem:[#allocation2 + $0x30] sm:$0xff]
        %v1229 = vld [vmem:[#allocation2 + $0x38] sm:$0xff]
        %v1230 = vld [vmem:[#allocation2 + $0x40] sm:$0xff]
        %v1231 = vld [vmem:[#allocation2 + $0x48] sm:$0xff]
        %v1232 = vld [vmem:[#allocation2 + $0x50] sm:$0xff]
        %v1233 = vld [vmem:[#allocation2 + $0x58] sm:$0xff]
        %v1234 = vld [vmem:[#allocation2 + $0x60] sm:$0xff]
        %v1235 = vld [vmem:[#allocation2 + $0x68] sm:$0xff]
        %v1236 = vld [vmem:[#allocation2 + $0x70] sm:$0xff]
        %v1237 = vld [vmem:[#allocation2 + $0x78] sm:$0xff]
        %v1238 = vld [vmem:[#allocation2 + $0x80] sm:$0xff]
        %v1239 = vld [vmem:[#allocation2 + $0x88] sm:$0xff]
        %v1240 = vld [vmem:[#allocation2 + $0x90] sm:$0xff]
        %v1241 = vld [vmem:[#allocation2 + $0x98] sm:$0xff]
        %v1242 = vld [vmem:[#allocation2 + $0xa0] sm:$0xff]
        %v1243 = vld [vmem:[#allocation2 + $0xa8] sm:$0xff]
        %v1244 = vld [vmem:[#allocation2 + $0xb0] sm:$0xff]
        %v1245 = vld [vmem:[#allocation2 + $0xb8] sm:$0xff]
        %v1246 = vld [vmem:[#allocation2 + $0xc0] sm:$0xff]
        %v1247 = vld [vmem:[#allocation2 + $0xc8] sm:$0xff]
        %v1248 = vld [vmem:[#allocation2 + $0xd0] sm:$0xff]
        %v1249 = vld [vmem:[#allocation2 + $0xd8] sm:$0xff]
        %v1250 = vld [vmem:[#allocation2 + $0xe0] sm:$0xff]
        %v1251 = vld [vmem:[#allocation2 + $0xe8] sm:$0xff]
        %v1252 = vld [vmem:[#allocation2 + $0xf0] sm:$0xff]
        %v1253 = vld [vmem:[#allocation2 + $0xf8] sm:$0xff]
        %v1254 = vld [vmem:[%s295] sm:$0x1]
        %v1256 = vperm.slane %v1254, 0
        %v1258 = vmul.f32 %v1222, %v1256
        %v1259 = vmul.f32 %v1223, %v1256
        %v1260 = vmul.f32 %v1224, %v1256
        %v1261 = vmul.f32 %v1225, %v1256
        %v1262 = vmul.f32 %v1226, %v1256
        %v1263 = vmul.f32 %v1227, %v1256
        %v1264 = vmul.f32 %v1228, %v1256
        %v1265 = vmul.f32 %v1229, %v1256
        %v1266 = vmul.f32 %v1230, %v1256
        %v1267 = vmul.f32 %v1231, %v1256
        %v1268 = vmul.f32 %v1232, %v1256
        %v1269 = vmul.f32 %v1233, %v1256
        %v1270 = vmul.f32 %v1234, %v1256
        %v1271 = vmul.f32 %v1235, %v1256
        %v1272 = vmul.f32 %v1236, %v1256
        %v1273 = vmul.f32 %v1237, %v1256
        %v1274 = vmul.f32 %v1238, %v1256
        %v1275 = vmul.f32 %v1239, %v1256
        %v1276 = vmul.f32 %v1240, %v1256
        %v1277 = vmul.f32 %v1241, %v1256
        %v1278 = vmul.f32 %v1242, %v1256
        %v1279 = vmul.f32 %v1243, %v1256
        %v1280 = vmul.f32 %v1244, %v1256
        %v1281 = vmul.f32 %v1245, %v1256
        %v1282 = vmul.f32 %v1246, %v1256
        %v1283 = vmul.f32 %v1247, %v1256
        %v1284 = vmul.f32 %v1248, %v1256
        %v1285 = vmul.f32 %v1249, %v1256
        %v1286 = vmul.f32 %v1250, %v1256
        %v1287 = vmul.f32 %v1251, %v1256
        %v1288 = vmul.f32 %v1252, %v1256
        %v1289 = vmul.f32 %v1253, %v1256
        %v1290 = vld [vmem:[%s298] sm:$0x1]
        %v1292 = vperm.slane %v1290, 0
        %v1294 = vadd.f32 %v1258, %v1292
        %v1295 = vadd.f32 %v1259, %v1292
        %v1296 = vadd.f32 %v1260, %v1292
        %v1297 = vadd.f32 %v1261, %v1292
        %v1298 = vadd.f32 %v1262, %v1292
        %v1299 = vadd.f32 %v1263, %v1292
        %v1300 = vadd.f32 %v1264, %v1292
        %v1301 = vadd.f32 %v1265, %v1292
        %v1302 = vadd.f32 %v1266, %v1292
        %v1303 = vadd.f32 %v1267, %v1292
        %v1304 = vadd.f32 %v1268, %v1292
        %v1305 = vadd.f32 %v1269, %v1292
        %v1306 = vadd.f32 %v1270, %v1292
        %v1307 = vadd.f32 %v1271, %v1292
        %v1308 = vadd.f32 %v1272, %v1292
        %v1309 = vadd.f32 %v1273, %v1292
        %v1310 = vadd.f32 %v1274, %v1292
        %v1311 = vadd.f32 %v1275, %v1292
        %v1312 = vadd.f32 %v1276, %v1292
        %v1313 = vadd.f32 %v1277, %v1292
        %v1314 = vadd.f32 %v1278, %v1292
        %v1315 = vadd.f32 %v1279, %v1292
        %v1316 = vadd.f32 %v1280, %v1292
        %v1317 = vadd.f32 %v1281, %v1292
        %v1318 = vadd.f32 %v1282, %v1292
        %v1319 = vadd.f32 %v1283, %v1292
        %v1320 = vadd.f32 %v1284, %v1292
        %v1321 = vadd.f32 %v1285, %v1292
        %v1322 = vadd.f32 %v1286, %v1292
        %v1323 = vadd.f32 %v1287, %v1292
        %v1324 = vadd.f32 %v1288, %v1292
        %v1325 = vadd.f32 %v1289, %v1292
        %v1326 = vmax.f32 %v1294, 0.0
        %v1327 = vmax.f32 %v1295, 0.0
        %v1328 = vmax.f32 %v1296, 0.0
        %v1329 = vmax.f32 %v1297, 0.0
        %v1330 = vmax.f32 %v1298, 0.0
        %v1331 = vmax.f32 %v1299, 0.0
        %v1332 = vmax.f32 %v1300, 0.0
        %v1333 = vmax.f32 %v1301, 0.0
        %v1334 = vmax.f32 %v1302, 0.0
        %v1335 = vmax.f32 %v1303, 0.0
        %v1336 = vmax.f32 %v1304, 0.0
        %v1337 = vmax.f32 %v1305, 0.0
        %v1338 = vmax.f32 %v1306, 0.0
        %v1339 = vmax.f32 %v1307, 0.0
        %v1340 = vmax.f32 %v1308, 0.0
        %v1341 = vmax.f32 %v1309, 0.0
        %v1342 = vmax.f32 %v1310, 0.0
        %v1343 = vmax.f32 %v1311, 0.0
        %v1344 = vmax.f32 %v1312, 0.0
        %v1345 = vmax.f32 %v1313, 0.0
        %v1346 = vmax.f32 %v1314, 0.0
        %v1347 = vmax.f32 %v1315, 0.0
        %v1348 = vmax.f32 %v1316, 0.0
        %v1349 = vmax.f32 %v1317, 0.0
        %v1350 = vmax.f32 %v1318, 0.0
        %v1351 = vmax.f32 %v1319, 0.0
        %v1352 = vmax.f32 %v1320, 0.0
        %v1353 = vmax.f32 %v1321, 0.0
        %v1354 = vmax.f32 %v1322, 0.0
        %v1355 = vmax.f32 %v1323, 0.0
        %v1356 = vmax.f32 %v1324, 0.0
        %v1357 = vmax.f32 %v1325, 0.0
        %1358 = vst [vmem:[%s306] sm:$0xff] %v1326
        %1359 = vst [vmem:[%s306 + $0x8] sm:$0xff] %v1327
        %1360 = vst [vmem:[%s306 + $0x10] sm:$0xff] %v1328
        %1361 = vst [vmem:[%s306 + $0x18] sm:$0xff] %v1329
        %1362 = vst [vmem:[%s306 + $0x20] sm:$0xff] %v1330
        %1363 = vst [vmem:[%s306 + $0x28] sm:$0xff] %v1331
        %1364 = vst [vmem:[%s306 + $0x30] sm:$0xff] %v1332
        %1365 = vst [vmem:[%s306 + $0x38] sm:$0xff] %v1333
        %1366 = vst [vmem:[%s306 + $0x40] sm:$0xff] %v1334
        %1367 = vst [vmem:[%s306 + $0x48] sm:$0xff] %v1335
        %1368 = vst [vmem:[%s306 + $0x50] sm:$0xff] %v1336
        %1369 = vst [vmem:[%s306 + $0x58] sm:$0xff] %v1337
        %1370 = vst [vmem:[%s306 + $0x60] sm:$0xff] %v1338
        %1371 = vst [vmem:[%s306 + $0x68] sm:$0xff] %v1339
        %1372 = vst [vmem:[%s306 + $0x70] sm:$0xff] %v1340
        %1373 = vst [vmem:[%s306 + $0x78] sm:$0xff] %v1341
        %1374 = vst [vmem:[%s306 + $0x80] sm:$0xff] %v1342
        %1375 = vst [vmem:[%s306 + $0x88] sm:$0xff] %v1343
        %1376 = vst [vmem:[%s306 + $0x90] sm:$0xff] %v1344
        %1377 = vst [vmem:[%s306 + $0x98] sm:$0xff] %v1345
        %1378 = vst [vmem:[%s306 + $0xa0] sm:$0xff] %v1346
        %1379 = vst [vmem:[%s306 + $0xa8] sm:$0xff] %v1347
        %1380 = vst [vmem:[%s306 + $0xb0] sm:$0xff] %v1348
        %1381 = vst [vmem:[%s306 + $0xb8] sm:$0xff] %v1349
        %1382 = vst [vmem:[%s306 + $0xc0] sm:$0xff] %v1350
        %1383 = vst [vmem:[%s306 + $0xc8] sm:$0xff] %v1351
        %1384 = vst [vmem:[%s306 + $0xd0] sm:$0xff] %v1352
        %1385 = vst [vmem:[%s306 + $0xd8] sm:$0xff] %v1353
        %1386 = vst [vmem:[%s306 + $0xe0] sm:$0xff] %v1354
        %1387 = vst [vmem:[%s306 + $0xe8] sm:$0xff] %v1355
        %1388 = vst [vmem:[%s306 + $0xf0] sm:$0xff] %v1356
        %1389 = vst [vmem:[%s306 + $0xf8] sm:$0xff] %v1357
      $region44: #{_lambda_.1} parent=35 // pred_fallthru
        _
      %s1390 = smul.u32 32, %s20
      %p1391 = scmp.lt.s32.totalorder %s1390, 63
      %s1392 = scalar_select %p1391, %s1390, 63
      %p1393 = scmp.lt.s32.totalorder %s21, 0
      %s1394 = scalar_select %p1393, %s21, 0
      %s1395 = sadd.s32 %s1394, %s1392
      %s1396 = smul.addr %s1395, 8
      %s1397 = scalar_lea.vmem %s4, %s1396
      // Predicated region
      $region45: #{_lambda_.1} parent=35 // pred_check
        %p1398 = pneg %p162
      $region46: #{_lambda_.1} parent=35 // pred_check_branch
        %1400 = sbr.rel (%p1398) target = $region48
      $region47: #{_lambda_.1} parent=35 // pred_region
        %s1401 = smul.u32 32, %s20
      $region48: #{_lambda_.1} parent=35 // pred_fallthru
        _
    $region36: #{_lambda_.1} parent=5 // pred_fallthru
      _
    %p1402 = scmp.le.s32.totalorder 2, %s10
    // Predicated region
    $region49: #{_lambda_.1} parent=5 // pred_check
      %p1403 = pneg %p1402
    $region50: #{_lambda_.1} parent=5 // pred_check_branch
      %1405 = sbr.rel (%p1403) target = $region52
    $region51: #{_lambda_.1} parent=5 // pred_region
      %s1406 = ssub.s32 %s10, 2
      // Predicated region
      $region53: #{_lambda_.1} parent=51 // pred_check
        %p1407 = pneg %p168
      $region54: #{_lambda_.1} parent=51 // pred_check_branch
        %1409 = sbr.rel (%p1407) target = $region56
      $region55: #{_lambda_.1} parent=51 // pred_region
        %s1410 = smul.u32 32, %s23
        %p1411 = scmp.lt.s32.totalorder %s1410, 63
        %s1412 = scalar_select %p1411, %s1410, 63
        %p1413 = scmp.lt.s32.totalorder %s24, 0
        %s1414 = scalar_select %p1413, %s24, 0
        %s1415 = sadd.s32 %s1414, %s1412
        %s1416 = smul.addr %s1415, 8
        %s1417 = scalar_lea.vmem %s4, %s1416
      $region56: #{_lambda_.1} parent=51 // pred_fallthru
        _
    $region52: #{_lambda_.1} parent=5 // pred_fallthru
      _
  $region6: #{_lambda_.1} parent=0 // loop_footer
    %s14 = sadd.s32 1, %s10
  $region7: #{_lambda_.1} parent=0 // loop_footer_branch
    %9 = sbr.rel target = $region3
  $region8: #{_lambda_.1} parent=0 // loop_exit
    _

</llo_original>
